<compile_context>
chip_gen: v7x
topology: tpu7x:2x2x1
jax: 0.10.0
libtpu: 0.0.40
codegen_flags: <defaults>
</compile_context>

<pallas_src>
import functools

import jax
import jax.numpy as jnp
from jax.experimental import pallas as pl
from jax.experimental.pallas import tpu as pltpu


def _adaptive_relu_act_kernel(x_ref, o_ref, *, base_scale):
    """One (row_tile, V) block: fully per-row compute, no cross-block state."""
    x = x_ref[...].astype(jnp.float32)          # cast only inside the kernel
    v = x.shape[-1]

    mean = jnp.mean(x, axis=-1, keepdims=True)
    centered = x - mean
    # torch.std defaults to the unbiased estimator (ddof = 1).
    var = jnp.sum(centered * centered, axis=-1, keepdims=True) * (1.0 / (v - 1))
    inv_std = 1.0 / (jnp.sqrt(var) + 1e-10)     # one divide per row, then multiply
    nx = centered * inv_std

    norm = jnp.sqrt(jnp.sum(nx * nx, axis=-1, keepdims=True))
    inv_norm = 1.0 / (norm + 1e-10)             # one divide per row
    scale = jnp.log1p(jnp.maximum(nx, 0.0) * (inv_norm * base_scale))

    # Per-element divide kept exact (approx reciprocal would miss 1e-5 tolerance).
    bounded = jnp.tanh(nx / (1.0 + scale))
    probs = (bounded + 1.0) * 0.5

    row_sum = jnp.sum(probs, axis=-1, keepdims=True)
    inv_row_sum = 1.0 / (row_sum + 1e-10)       # one exact divide per row
    o_ref[...] = (probs * inv_row_sum).astype(o_ref.dtype)


def _pick_row_tile(rows, vocab, in_bytes, out_bytes, block_budget_bytes=16 << 20):
    """Largest row tile whose double-buffered in+out blocks fit the VMEM budget."""
    per_row = 2 * vocab * (in_bytes + out_bytes)      # 2x buffering, in + out
    rt = block_budget_bytes // max(per_row, 1)
    rt = max(8, min(1024, int(rt)))
    rt = (rt // 8) * 8                                # sublane-aligned
    rows_padded = ((rows + 7) // 8) * 8
    return max(8, min(rt, rows_padded))


def adaptive_gradient_stable_relu_activation(x, *, base_scale=0.5, row_tile=None):
    """x: (batch, seq, vocab) logits -> per-row probability distribution."""
    B, S, V = x.shape
    rows = B * S
    x2 = x.reshape(rows, V)

    itemsize = jnp.dtype(x.dtype).itemsize
    if row_tile is None:
        row_tile = _pick_row_tile(rows, V, itemsize, itemsize)

    kernel = functools.partial(_adaptive_relu_act_kernel,
                               base_scale=float(base_scale))

    # NOTE: block keeps the full vocab axis (lane-dense if V % 128 == 0);
    # padding V in the wrapper is intentionally NOT done since it would
    # change the per-row mean/std/norm/sum reductions.
    probs = pl.pallas_call(
        kernel,
        out_shape=jax.ShapeDtypeStruct((rows, V), x.dtype),
        grid=(pl.cdiv(rows, row_tile),),
        in_specs=[pl.BlockSpec((row_tile, V), lambda i: (i, 0))],
        out_specs=pl.BlockSpec((row_tile, V), lambda i: (i, 0)),
        compiler_params=pltpu.CompilerParams(
            dimension_semantics=("parallel",),       # rows independent -> megacore OK
            vmem_limit_bytes=32 << 20,               # raise v5e's 16 MiB default,
        ),                                           # stay under v7x's 64 MiB physical
    )(x2)

    return probs.reshape(B, S, V)


def _reference(x, base_scale=0.5):
    mean = jnp.mean(x, axis=-1, keepdims=True)
    std = jnp.std(x, axis=-1, keepdims=True, ddof=1) + 1e-10   # torch unbiased std
    nx = (x - mean) / std
    norm = jnp.sqrt(jnp.sum(nx * nx, axis=-1, keepdims=True))
    scale = jnp.log1p(jnp.maximum(nx, 0.0) / (norm + 1e-10) * base_scale)
    bounded = jnp.tanh(nx / (1.0 + scale))
    probs = (bounded + 1.0) / 2.0
    return probs / (jnp.sum(probs, axis=-1, keepdims=True) + 1e-10)


if __name__ == "__main__":
    key = jax.random.PRNGKey(0)
    B, S, V = 2, 8, 128                      # batch, seq, vocab (lane-dense V)
    x = jax.random.normal(key, (B, S, V), dtype=jnp.float32) * 3.0

    probs = adaptive_gradient_stable_relu_activation(x, base_scale=0.5)
    probs = jax.block_until_ready(probs)

    ref = _reference(x, base_scale=0.5)
    assert probs.shape == (B, S, V)
    assert jnp.allclose(probs, ref, atol=1e-5, rtol=1e-5), \
        float(jnp.max(jnp.abs(probs - ref)))
    # each row is a probability distribution
    assert jnp.allclose(jnp.sum(probs, axis=-1), 1.0, atol=1e-4)
    assert bool(jnp.all(probs >= 0.0))

    print("KERNEL_OK")
</pallas_src>

<mosaic_0001>
module attributes {stable_mosaic.version = 11 : i64} {
  func.func @_adaptive_relu_act_kernel(%arg0: i32, %arg1: memref<16x128xf32, #tpu.memory_space<vmem>>, %arg2: memref<16x128xf32, #tpu.memory_space<vmem>>) attributes {dimension_semantics = [#tpu.dimension_semantics<parallel>], iteration_bounds = array<i64: 1>, scalar_prefetch = 0 : i64, scratch_operands = 0 : i64, tpu.core_type = #tpu.core_type<tc>, window_params = [{transform_indices = @transform_0, window_bounds = array<i64: 16, 128>}, {transform_indices = @transform_1, window_bounds = array<i64: 16, 128>}]} {
    %c0 = arith.constant 0 : index
    %c0_0 = arith.constant 0 : index
    %0 = vector.load %arg1[%c0, %c0_0] : memref<16x128xf32, #tpu.memory_space<vmem>>, vector<16x128xf32>
    %cst = arith.constant dense<0.000000e+00> : vector<16xf32>
    %1 = vector.multi_reduction <add>, %0, %cst [1] : vector<16x128xf32> to vector<16xf32>
    %2 = vector.shape_cast %1 : vector<16xf32> to vector<16x1xf32>
    %cst_1 = arith.constant 1.280000e+02 : f32
    %3 = vector.broadcast %cst_1 : f32 to vector<16x1xf32>
    %4 = arith.divf %2, %3 : vector<16x1xf32>
    %5 = vector.broadcast %4 : vector<16x1xf32> to vector<16x128xf32>
    %6 = arith.subf %0, %5 : vector<16x128xf32>
    %7 = arith.mulf %6, %6 : vector<16x128xf32>
    %cst_2 = arith.constant dense<0.000000e+00> : vector<16xf32>
    %8 = vector.multi_reduction <add>, %7, %cst_2 [1] : vector<16x128xf32> to vector<16xf32>
    %9 = vector.shape_cast %8 : vector<16xf32> to vector<16x1xf32>
    %cst_3 = arith.constant 0.00787401571 : f32
    %10 = vector.broadcast %cst_3 : f32 to vector<16x1xf32>
    %11 = arith.mulf %9, %10 : vector<16x1xf32>
    %12 = math.sqrt %11 : vector<16x1xf32>
    %cst_4 = arith.constant 1.000000e-10 : f32
    %13 = vector.broadcast %cst_4 : f32 to vector<16x1xf32>
    %14 = arith.addf %12, %13 : vector<16x1xf32>
    %cst_5 = arith.constant 1.000000e+00 : f32
    %15 = vector.broadcast %cst_5 : f32 to vector<16x1xf32>
    %16 = arith.divf %15, %14 : vector<16x1xf32>
    %17 = vector.broadcast %16 : vector<16x1xf32> to vector<16x128xf32>
    %18 = arith.mulf %6, %17 : vector<16x128xf32>
    %19 = arith.mulf %18, %18 : vector<16x128xf32>
    %cst_6 = arith.constant dense<0.000000e+00> : vector<16xf32>
    %20 = vector.multi_reduction <add>, %19, %cst_6 [1] : vector<16x128xf32> to vector<16xf32>
    %21 = vector.shape_cast %20 : vector<16xf32> to vector<16x1xf32>
    %22 = math.sqrt %21 : vector<16x1xf32>
    %cst_7 = arith.constant 1.000000e-10 : f32
    %23 = vector.broadcast %cst_7 : f32 to vector<16x1xf32>
    %24 = arith.addf %22, %23 : vector<16x1xf32>
    %cst_8 = arith.constant 1.000000e+00 : f32
    %25 = vector.broadcast %cst_8 : f32 to vector<16x1xf32>
    %26 = arith.divf %25, %24 : vector<16x1xf32>
    %cst_9 = arith.constant 0.000000e+00 : f32
    %27 = vector.broadcast %cst_9 : f32 to vector<16x128xf32>
    %28 = arith.maximumf %18, %27 : vector<16x128xf32>
    %cst_10 = arith.constant 5.000000e-01 : f32
    %29 = vector.broadcast %cst_10 : f32 to vector<16x1xf32>
    %30 = arith.mulf %26, %29 : vector<16x1xf32>
    %31 = vector.broadcast %30 : vector<16x1xf32> to vector<16x128xf32>
    %32 = arith.mulf %28, %31 : vector<16x128xf32>
    %33 = math.log1p %32 : vector<16x128xf32>
    %cst_11 = arith.constant 1.000000e+00 : f32
    %34 = vector.broadcast %cst_11 : f32 to vector<16x128xf32>
    %35 = arith.addf %34, %33 : vector<16x128xf32>
    %36 = arith.divf %18, %35 : vector<16x128xf32>
    %37 = math.tanh %36 : vector<16x128xf32>
    %cst_12 = arith.constant 1.000000e+00 : f32
    %38 = vector.broadcast %cst_12 : f32 to vector<16x128xf32>
    %39 = arith.addf %37, %38 : vector<16x128xf32>
    %cst_13 = arith.constant 5.000000e-01 : f32
    %40 = vector.broadcast %cst_13 : f32 to vector<16x128xf32>
    %41 = arith.mulf %39, %40 : vector<16x128xf32>
    %cst_14 = arith.constant dense<0.000000e+00> : vector<16xf32>
    %42 = vector.multi_reduction <add>, %41, %cst_14 [1] : vector<16x128xf32> to vector<16xf32>
    %43 = vector.shape_cast %42 : vector<16xf32> to vector<16x1xf32>
    %cst_15 = arith.constant 1.000000e-10 : f32
    %44 = vector.broadcast %cst_15 : f32 to vector<16x1xf32>
    %45 = arith.addf %43, %44 : vector<16x1xf32>
    %cst_16 = arith.constant 1.000000e+00 : f32
    %46 = vector.broadcast %cst_16 : f32 to vector<16x1xf32>
    %47 = arith.divf %46, %45 : vector<16x1xf32>
    %48 = vector.broadcast %47 : vector<16x1xf32> to vector<16x128xf32>
    %49 = arith.mulf %41, %48 : vector<16x128xf32>
    %c0_17 = arith.constant 0 : index
    %c0_18 = arith.constant 0 : index
    %50 = vector.load %arg2[%c0_17, %c0_18] : memref<16x128xf32, #tpu.memory_space<vmem>>, vector<16x128xf32>
    tpu.vector_store %arg2[%c0_17, %c0_18], %49 {strides = array<i32>} : memref<16x128xf32, #tpu.memory_space<vmem>>, vector<16x128xf32>,
    return
  }
  func.func @transform_0(%arg0: i32) -> (i32, i32) {
    %c0_i32 = arith.constant 0 : i32
    %c0_i32_0 = arith.constant 0 : i32
    return %arg0, %c0_i32 : i32, i32
  }
  func.func @transform_1(%arg0: i32) -> (i32, i32) {
    %c0_i32 = arith.constant 0 : i32
    %c0_i32_0 = arith.constant 0 : i32
    return %arg0, %c0_i32 : i32, i32
  }
}

</mosaic_0001>

<llo_original>
// kernel: tpu_custom_call.1
$region0: #{tpu_custom_call.1}
  #allocation0 [shape = 'u32[]', space=smem, size = 0x4, offset = 0x4, fixed_abs, tag = 'smem constant byte address 0x4 - core index']
  #allocation1 [shape = 'u32[144,128]{1,0:T(1,128)}', space=vmem, size = 0x12000, scoped, tag = 'internal scratch']
  %s0 = inlined_call_operand.hbm [shape: f32[16,128], index: 0, kind: input, shape index: {}]
  %s1 = inlined_call_operand.hbm [shape: f32[16,128], index: 1, kind: output, shape index: {}]
  %s2 = sld [smem:[#allocation0]]
  $region18: #{tpu_custom_call.1} parent=0
    _
  %s4 = ssub.s32 1, %s2
  %s5 = scalar_select 0, %s4, %s2
  $region1: #{tpu_custom_call.1} parent=0
    #allocation2 [shape = 'u8[8192]{0}', space=vmem, size = 0x2000, scoped, tag = 'input window, operand 0, single buffered']
    #allocation3 [shape = 's32[1]{0}', space=sflag, size = 0x4, scoped, tag = 'scoped memory for tpu_custom_call.1']
    #allocation4 [shape = 's32[1]{0}', space=sflag, size = 0x4, scoped, tag = 'scoped memory for tpu_custom_call.1']
    #allocation5 [shape = 'u8[8192]{0}', space=vmem, size = 0x2000, scoped, tag = 'output window, operand 0, single buffered']
    %6 = vsyncpa [#allocation3], 0
    %7 = vsyncpa [#allocation4], 0
    // Predicated region
    $region2: #{tpu_custom_call.1} parent=1 // pred_check
      _
    $region3: #{tpu_custom_call.1} parent=1 // pred_check_branch
      %9 = sbr.rel (0) target = $region5
    $region4: #{tpu_custom_call.1} parent=1 // pred_region
      %s11 = ssub.s32 256, 256
      %12 = vsyncadd [#allocation3], %s11
      %s13 = sshll.u32 [#allocation2], 4
      %s14 = int_to_ptr.vmem [resolvable:$true] %s13
      %19 = dma.hbm_to_vmem [thread:$0]  %s0, 256, %s14, [#allocation3], 128, 128, 8
    $region5: #{tpu_custom_call.1} parent=1 // pred_fallthru
      _
    // Predicated region
    $region6: #{tpu_custom_call.1} parent=1 // pred_check
      _
    $region7: #{tpu_custom_call.1} parent=1 // pred_check_branch
      %21 = sbr.rel (0) target = $region9
    $region8: #{tpu_custom_call.1} parent=1 // pred_region
      %22 = dma.done [#allocation3], 256
    $region9: #{tpu_custom_call.1} parent=1 // pred_fallthru
      _
    %v23 = vld [vmem:[#allocation2] sm:$0xff]
    %v24 = vld [vmem:[#allocation2 + $0x8] sm:$0xff]
    %25 = vadd.xlane.f32.xlu0 %v23
    %v26 = vpop.xlane.xlu0 %25
    %27 = vadd.xlane.f32.xlu0 %v24
    %v28 = vpop.xlane.xlu0 %27
    %v29 = vrcp.pop 128.0
    %v30 = vmul.f32 %v26, %v29
    %v31 = vmul.f32 %v28, %v29
    %v32 = vsub.f32 %v23, %v30
    %v33 = vsub.f32 %v24, %v31
    %v34 = vmul.f32 %v32, %v32
    %v35 = vmul.f32 %v33, %v33
    %36 = vadd.xlane.f32.xlu0 %v34
    %v37 = vpop.xlane.xlu0 %36
    %38 = vadd.xlane.f32.xlu0 %v35
    %v39 = vpop.xlane.xlu0 %38
    %v40 = vmul.f32 %v37, 0.007874016
    %v41 = vmul.f32 %v39, 0.007874016
    %v42 = vrsqrt.pop %v40
    %v43 = vmul.f32 %v40, %v42
    %vm44 = vcmp.eq.f32.partialorder %v40, inf
    %v45 = vsel %vm44, %v40, %v43
    %vm46 = vcmp.eq.f32.partialorder %v40, 0.0
    %v47 = vand.u32 %v40, 2147483648
    %v48 = vsel %vm46, %v47, %v45
    %v49 = vrsqrt.pop %v41
    %v50 = vmul.f32 %v41, %v49
    %vm51 = vcmp.eq.f32.partialorder %v41, inf
    %v52 = vsel %vm51, %v41, %v50
    %vm53 = vcmp.eq.f32.partialorder %v41, 0.0
    %v54 = vand.u32 %v41, 2147483648
    %v55 = vsel %vm53, %v54, %v52
    %v56 = vadd.f32 %v48, 1e-10
    %v57 = vadd.f32 %v55, 1e-10
    %v58 = vrcp.pop %v56
    %v59 = vmul.f32 1.0, %v58
    %v60 = vrcp.pop %v57
    %v61 = vmul.f32 1.0, %v60
    %v62 = vmul.f32 %v32, %v59
    %v63 = vmul.f32 %v33, %v61
    %v64 = vmul.f32 %v62, %v62
    %v65 = vmul.f32 %v63, %v63
    %66 = vadd.xlane.f32.xlu0 %v64
    %v67 = vpop.xlane.xlu0 %66
    %68 = vadd.xlane.f32.xlu0 %v65
    %v69 = vpop.xlane.xlu0 %68
    %v70 = vrsqrt.pop %v67
    %v71 = vmul.f32 %v67, %v70
    %vm72 = vcmp.eq.f32.partialorder %v67, inf
    %v73 = vsel %vm72, %v67, %v71
    %vm74 = vcmp.eq.f32.partialorder %v67, 0.0
    %v75 = vand.u32 %v67, 2147483648
    %v76 = vsel %vm74, %v75, %v73
    %v77 = vrsqrt.pop %v69
    %v78 = vmul.f32 %v69, %v77
    %vm79 = vcmp.eq.f32.partialorder %v69, inf
    %v80 = vsel %vm79, %v69, %v78
    %vm81 = vcmp.eq.f32.partialorder %v69, 0.0
    %v82 = vand.u32 %v69, 2147483648
    %v83 = vsel %vm81, %v82, %v80
    %v84 = vadd.f32 %v76, 1e-10
    %v85 = vadd.f32 %v83, 1e-10
    %v86 = vrcp.pop %v84
    %v87 = vmul.f32 1.0, %v86
    %v88 = vrcp.pop %v85
    %v89 = vmul.f32 1.0, %v88
    %v90 = vmax.f32 %v62, 0.0
    %v91 = vmax.f32 %v63, 0.0
    %v92 = vmul.f32 %v87, 0.5
    %v93 = vmul.f32 %v89, 0.5
    %v94 = vmul.f32 %v90, %v92
    %v95 = vmul.f32 %v91, %v93
    %v96 = vadd.f32 %v94, 1.0
    %v97 = vlog2.pop %v96
    %v98 = vmul.f32 %v97, 0.6931472
    %v99 = vmul.f32 -0.5, %v94
    %v100 = vadd.f32 %v99, 1.0
    %v101 = vmul.f32 %v100, %v94
    %v102 = vand.u32 2147483647, %v94
    %vm103 = vcmp.lt.f32.partialorder %v102, 0.0004427343
    %v104 = vsel %vm103, %v101, %v98
    %v105 = vadd.f32 %v95, 1.0
    %v106 = vlog2.pop %v105
    %v107 = vmul.f32 %v106, 0.6931472
    %v108 = vmul.f32 -0.5, %v95
    %v109 = vadd.f32 %v108, 1.0
    %v110 = vmul.f32 %v109, %v95
    %v111 = vand.u32 2147483647, %v95
    %vm112 = vcmp.lt.f32.partialorder %v111, 0.0004427343
    %v113 = vsel %vm112, %v110, %v107
    %v114 = vadd.f32 %v104, 1.0
    %v115 = vadd.f32 %v113, 1.0
    %v116 = vrcp.pop %v114
    %v117 = vmul.f32 %v62, %v116
    %v118 = vrcp.pop %v115
    %v119 = vmul.f32 %v63, %v118
    %v120 = vtanh.pop %v117
    %v121 = vtanh.pop %v119
    %v122 = vadd.f32 %v120, 1.0
    %v123 = vadd.f32 %v121, 1.0
    %v124 = vmul.f32 %v122, 0.5
    %v125 = vmul.f32 %v123, 0.5
    %126 = vadd.xlane.f32.xlu0 %v124
    %v127 = vpop.xlane.xlu0 %126
    %128 = vadd.xlane.f32.xlu0 %v125
    %v129 = vpop.xlane.xlu0 %128
    %v130 = vadd.f32 %v127, 1e-10
    %v131 = vadd.f32 %v129, 1e-10
    %v132 = vrcp.pop %v130
    %v133 = vmul.f32 1.0, %v132
    %v134 = vrcp.pop %v131
    %v135 = vmul.f32 1.0, %v134
    %v136 = vmul.f32 %v124, %v133
    %v137 = vmul.f32 %v125, %v135
    %138 = vst [vmem:[#allocation5] sm:$0xff] %v136
    %139 = vst [vmem:[#allocation5 + $0x8] sm:$0xff] %v137
    // Predicated region
    $region10: #{tpu_custom_call.1} parent=1 // pred_check
      _
    $region11: #{tpu_custom_call.1} parent=1 // pred_check_branch
      %141 = sbr.rel (0) target = $region13
    $region12: #{tpu_custom_call.1} parent=1 // pred_region
      %s143 = ssub.s32 256, 256
      %144 = vsyncadd [#allocation4], %s143
      %s145 = sshll.u32 [#allocation5], 4
      %s146 = int_to_ptr.vmem [resolvable:$true] %s145
      %151 = dma.vmem_to_hbm [thread:$0]  %s146, 256, %s1, [#allocation4], 128, 128, 8
    $region13: #{tpu_custom_call.1} parent=1 // pred_fallthru
      _
    // Predicated region
    $region14: #{tpu_custom_call.1} parent=1 // pred_check
      _
    $region15: #{tpu_custom_call.1} parent=1 // pred_check_branch
      %153 = sbr.rel (0) target = $region17
    $region16: #{tpu_custom_call.1} parent=1 // pred_region
      %154 = dma.done [#allocation4], 256
    $region17: #{tpu_custom_call.1} parent=1 // pred_fallthru
      _
    %155 = vsyncpa [#allocation3], 1
    %156 = vsyncpa [#allocation4], 1

</llo_original>
